<compile_context>
chip_gen: v7x
topology: tpu7x:2x2x1
jax: 0.10.0
libtpu: 0.0.40
codegen_flags: <defaults>
</compile_context>

<pallas_src>
import functools

import jax
import jax.numpy as jnp
from jax import lax
from jax.experimental import pallas as pl
from jax.experimental.pallas import tpu as pltpu

KERNEL_SIZE = 3
DILATION = 1
LEAKY_SLOPE = 0.2
EPS = 1e-5          # InstanceNorm1d default eps
LANE = 128


def _leaky(v):
    return jnp.where(v >= 0, v, LEAKY_SLOPE * v)


# ------------------------------- Pallas kernel -------------------------------
def _resblock_kernel(x_ref, w1_ref, w2_ref, o_ref, *, k, dil, true_l, nb,
                     mm_dtype):
    lp = x_ref.shape[-1]                     # lane-padded length (mult of 128)
    inv_l = 1.0 / true_l
    # Hoisted once per grid step (never rebuilt inside the sample loop).
    col = lax.broadcasted_iota(jnp.int32, (1, lp), 1)
    valid = col < true_l                     # (1, lp) lane mask

    # Weights stay resident across the fori_loop (loaded once per grid step).
    w1 = w1_ref[...]
    w2 = w2_ref[...]

    def conv1d(v, wf, d):
        # 'same' cross-correlation (odd k): y[:,l] = sum_t W_t @ v[:, l+t*d-pad]
        # v has a zero tail of >= pad lanes beyond true_l, so the roll
        # wraparound reads zeros -> implicit zero padding, no per-tap masks.
        pad = d * (k - 1) // 2
        parts = []
        for t in range(k):
            off = t * d - pad
            if off == 0:
                parts.append(v)
            else:
                # jnp.roll convention: out[l] = v[(l - shift) % lp]  ->  shift = -off
                parts.append(pltpu.roll(v, (-off) % lp, axis=1))
        # TODO(synk): on v5e, if the vst slot saturates assembling this
        # (k*C, lp) operand, switch to k accumulating dots instead.
        stacked = jnp.concatenate(parts, axis=0).astype(mm_dtype)     # (k*C, lp)
        return jnp.dot(wf, stacked, preferred_element_type=jnp.float32)

    def instance_norm(y):
        # Tail lanes of the conv output are garbage (wrap picked up real data):
        # mask before the sums, re-zero on the way out so the next conv again
        # sees implicit zero padding.
        ym = jnp.where(valid, y, 0.0)
        s = jnp.sum(ym, axis=1, keepdims=True)
        ss = jnp.sum(ym * ym, axis=1, keepdims=True)
        mean = s * inv_l
        var = jnp.maximum(ss * inv_l - mean * mean, 0.0)
        return jnp.where(valid, (ym - mean) * lax.rsqrt(var + EPS), 0.0)

    def body(i, carry):
        x = x_ref[i].astype(jnp.float32)                       # (C, lp), zero tail
        h = instance_norm(conv1d(_leaky(x), w1, dil))
        h = instance_norm(conv1d(_leaky(h), w2, 1))
        o_ref[i] = (x + h).astype(o_ref.dtype)
        return carry

    # fori_loop (not a static Python loop) bounds live ranges to ONE sample's
    # working set -> no nb-fold VMEM/vreg blowup.
    lax.fori_loop(0, nb, body, None)


# --------------------------------- wrapper -----------------------------------
def resblock_pallas(x, w1, w2, *, kernel_size=KERNEL_SIZE, dilation=DILATION,
                    n_block=None, matmul_dtype=jnp.bfloat16):
    N, C, L = x.shape
    assert w1.shape == (C, C, kernel_size) and w2.shape == (C, C, kernel_size)
    assert kernel_size % 2 == 1, "'same' padding formula assumes odd kernel"

    max_pad = dilation * (kernel_size - 1) // 2
    # Lane-dense L, with >= max_pad trailing zero lanes so roll wraparound
    # lands in zeros ('same' padding for free).
    lp = ((L + max_pad + LANE - 1) // LANE) * LANE

    # ---- chip-aware VMEM budget -------------------------------------------
    try:
        vmem_cap = int(pltpu.get_tpu_info().vmem_capacity_bytes)
    except Exception:
        vmem_cap = 64 * 1024 * 1024          # conservative (v7x per-TC size)
    vmem_limit = min(vmem_cap * 3 // 4, 100 * 1024 * 1024)
    vmem_limit = max(vmem_limit, 32 * 1024 * 1024)

    itemsize = x.dtype.itemsize
    w_itemsize = jnp.dtype(matmul_dtype).itemsize
    slab = C * lp * itemsize                         # one sample's I/O block
    w_bytes = 2 * C * kernel_size * C * w_itemsize   # both fused weights
    # per-sample f32 intermediates inside the fori_loop body (x, h, stacked, y)
    scratch = (4 + kernel_size) * C * lp * 4

    if n_block is None:
        budget = max(vmem_limit // 2 - w_bytes - scratch, slab)
        # in + out blocks, each double-buffered -> 4 * slab per sample
        n_block = max(1, min(N, budget // (4 * slab)))
    if N >= 2:
        # keep >= 2 grid steps so dimension_semantics=("parallel",) actually
        # feeds both TensorCores on v7x (free elsewhere).
        n_block = max(1, min(n_block, (N + 1) // 2))
    np_ = ((N + n_block - 1) // n_block) * n_block

    xp = x
    if np_ != N or lp != L:
        xp = jnp.pad(x, ((0, np_ - N), (0, 0), (0, lp - L)))

    # Fused, lane-dense weights: (Cout, k*Cin), taps contiguous along the
    # contraction axis; one MXU matmul per conv.  Conv biases are dropped:
    # non-affine InstanceNorm subtracts the per-channel mean, so they cancel.
    w1f = jnp.transpose(w1, (0, 2, 1)).reshape(C, kernel_size * C).astype(matmul_dtype)
    w2f = jnp.transpose(w2, (0, 2, 1)).reshape(C, kernel_size * C).astype(matmul_dtype)

    kern = functools.partial(
        _resblock_kernel, k=kernel_size, dil=dilation, true_l=L, nb=n_block,
        mm_dtype=matmul_dtype)

    cost = pl.CostEstimate(
        flops=2 * 2 * N * (kernel_size * C) * C * L,     # two MXU matmuls/sample
        transcendentals=4 * N * C,                       # rsqrt per channel/stage
        bytes_accessed=2 * np_ * C * lp * itemsize + w_bytes)

    # TODO(synk): for very large C*L (v7x 64 MiB VMEM) add an L-tile grid axis
    # with a two-pass norm; for small C batch samples into one wide matmul.
    def build(single_buffer_weights):
        if single_buffer_weights:
            def w_spec():
                return pl.BlockSpec((C, kernel_size * C), lambda n: (0, 0),
                                    pipeline_mode=pl.Buffered(1))
        else:
            def w_spec():
                return pl.BlockSpec((C, kernel_size * C), lambda n: (0, 0))
        return pl.pallas_call(
            kern,
            out_shape=jax.ShapeDtypeStruct((np_, C, lp), x.dtype),
            grid_spec=pltpu.PrefetchScalarGridSpec(
                num_scalar_prefetch=0,
                grid=(np_ // n_block,),
                in_specs=[
                    pl.BlockSpec((n_block, C, lp), lambda n: (n, 0, 0)),
                    w_spec(),
                    w_spec(),
                ],
                out_specs=pl.BlockSpec((n_block, C, lp), lambda n: (n, 0, 0)),
            ),
            compiler_params=pltpu.CompilerParams(
                dimension_semantics=("parallel",),
                vmem_limit_bytes=int(vmem_limit)),
            cost_estimate=cost,
        )

    try:
        out = build(True)(xp, w1f, w2f)      # weights single-buffered
    except Exception:
        out = build(False)(xp, w1f, w2f)     # fallback: default double-buffering

    if np_ != N or lp != L:
        out = out[:N, :, :L]
    return out


# ------------------------- parameter setup (glue) ----------------------------
def spectral_normalize(w, n_iters=50):
    # PyTorch spectral_norm divides the weight by its largest singular value
    # (power iteration on the (Cout, Cin*K) reshape); one-time host transform.
    wm = w.reshape(w.shape[0], -1).astype(jnp.float32)
    u = jnp.ones((wm.shape[0],), jnp.float32) / jnp.sqrt(wm.shape[0])
    for _ in range(n_iters):
        v = wm.T @ u
        v = v / (jnp.linalg.norm(v) + 1e-12)
        u = wm @ v
        u = u / (jnp.linalg.norm(u) + 1e-12)
    sigma = u @ (wm @ v)
    return (w / sigma).astype(w.dtype)


def init_conv_params(key, channels, kernel_size):
    # PyTorch Conv1d default init: uniform(-1/sqrt(fan_in), 1/sqrt(fan_in)).
    kw, kb = jax.random.split(key)
    bound = 1.0 / jnp.sqrt(channels * kernel_size)
    w = jax.random.uniform(kw, (channels, channels, kernel_size),
                           jnp.float32, -bound, bound)
    b = jax.random.uniform(kb, (channels,), jnp.float32, -bound, bound)
    return w, b


# ---------------------------- pure-JAX reference -----------------------------
def resblock_ref(x, w1, b1, w2, b2, kernel_size=KERNEL_SIZE, dilation=DILATION):
    def conv(v, w, b, d):
        pad = d * (kernel_size - 1) // 2
        y = lax.conv_general_dilated(
            v, w, window_strides=(1,), padding=[(pad, pad)], rhs_dilation=(d,),
            dimension_numbers=("NCH", "OIH", "NCH"))
        return y + b[None, :, None]

    def inorm(v):
        m = v.mean(axis=2, keepdims=True)
        var = ((v - m) ** 2).mean(axis=2, keepdims=True)
        return (v - m) / jnp.sqrt(var + EPS)

    h = inorm(conv(_leaky(x), w1, b1, dilation))
    h = inorm(conv(_leaky(h), w2, b2, 1))
    return x + h


if __name__ == "__main__":
    N, C, L = 2, 8, 16
    key = jax.random.PRNGKey(0)
    kx, k1, k2 = jax.random.split(key, 3)

    x = jax.random.normal(kx, (N, C, L), jnp.float32)
    w1, b1 = init_conv_params(k1, C, KERNEL_SIZE)
    w2, b2 = init_conv_params(k2, C, KERNEL_SIZE)
    # use_spectral_norm=True -> weights divided by their spectral norm
    w1 = spectral_normalize(w1)
    w2 = spectral_normalize(w2)

    # Reference keeps the conv biases (PyTorch semantics); they cancel inside
    # the non-affine InstanceNorm, so the bias-free kernel must still match.
    ref = resblock_ref(x, w1, b1, w2, b2)

    # Exact-parity path (f32 MXU operands) -- validates conv/roll/norm logic.
    out_f32 = jax.block_until_ready(
        resblock_pallas(x, w1, w2, matmul_dtype=jnp.float32))
    assert out_f32.shape == (N, C, L)
    assert jnp.allclose(out_f32, ref, rtol=1e-4, atol=1e-4), \
        "f32 kernel mismatch vs JAX reference"

    # Fast path (default): bf16 MXU operands, f32 accumulation.
    out_bf16 = jax.block_until_ready(resblock_pallas(x, w1, w2))
    assert out_bf16.shape == (N, C, L)
    assert jnp.allclose(out_bf16, ref, rtol=1e-1, atol=1e-1), \
        "bf16 kernel mismatch vs JAX reference"

    print("KERNEL_OK")
</pallas_src>

<mosaic_0001>
module attributes {stable_mosaic.version = 11 : i64} {
  func.func @_resblock_kernel(%arg0: i32, %arg1: memref<1x8x128xf32, #tpu.memory_space<vmem>>, %arg2: memref<8x24xf32, #tpu.memory_space<vmem>>, %arg3: memref<8x24xf32, #tpu.memory_space<vmem>>, %arg4: memref<1x8x128xf32, #tpu.memory_space<vmem>>) attributes {dimension_semantics = [#tpu.dimension_semantics<parallel>], iteration_bounds = array<i64: 2>, scalar_prefetch = 0 : i64, scratch_operands = 0 : i64, tpu.core_type = #tpu.core_type<tc>, window_params = [{transform_indices = @transform_0, window_bounds = array<i64: 1, 8, 128>}, {pipeline_mode = #tpu.pipeline_mode<synchronous>, transform_indices = @transform_1, window_bounds = array<i64: 8, 24>}, {pipeline_mode = #tpu.pipeline_mode<synchronous>, transform_indices = @transform_2, window_bounds = array<i64: 8, 24>}, {transform_indices = @transform_3, window_bounds = array<i64: 1, 8, 128>}]} {
    %0 = tpu.iota {dimensions = array<i32: 1>} : vector<1x128xi32>
    %c16_i32 = arith.constant 16 : i32
    %1 = vector.broadcast %c16_i32 : i32 to vector<1x128xi32>
    %2 = arith.cmpi slt, %0, %1 : vector<1x128xi32>
    %c0 = arith.constant 0 : index
    %c0_0 = arith.constant 0 : index
    %3 = vector.load %arg2[%c0, %c0_0] : memref<8x24xf32, #tpu.memory_space<vmem>>, vector<8x24xf32>
    %c0_1 = arith.constant 0 : index
    %c0_2 = arith.constant 0 : index
    %4 = vector.load %arg3[%c0_1, %c0_2] : memref<8x24xf32, #tpu.memory_space<vmem>>, vector<8x24xf32>
    %c0_i32 = arith.constant 0 : i32
    %5 = arith.index_cast %c0_i32 : i32 to index
    %c0_3 = arith.constant 0 : index
    %c0_4 = arith.constant 0 : index
    %6 = vector.load %arg1[%5, %c0_3, %c0_4] : memref<1x8x128xf32, #tpu.memory_space<vmem>>, vector<1x8x128xf32>
    %7 = vector.shape_cast %6 : vector<1x8x128xf32> to vector<8x128xf32>
    %cst = arith.constant 0.000000e+00 : f32
    %8 = vector.broadcast %cst : f32 to vector<8x128xf32>
    %9 = arith.cmpf oge, %7, %8 : vector<8x128xf32>
    %cst_5 = arith.constant 2.000000e-01 : f32
    %10 = vector.broadcast %cst_5 : f32 to vector<8x128xf32>
    %11 = arith.mulf %10, %7 : vector<8x128xf32>
    %12 = arith.select %9, %7, %11 : vector<8x128xi1>, vector<8x128xf32>
    %c1_i32 = arith.constant 1 : i32
    %13 = tpu.dynamic_rotate %12 by %c1_i32 dim 1 : vector<8x128xf32>, i32 -> vector<8x128xf32>
    %c127_i32 = arith.constant 127 : i32
    %14 = tpu.dynamic_rotate %12 by %c127_i32 dim 1 : vector<8x128xf32>, i32 -> vector<8x128xf32>
    %15 = tpu.concatenate %13, %12, %14 in 0 : vector<8x128xf32>, vector<8x128xf32>, vector<8x128xf32> -> vector<24x128xf32>
    %cst_6 = arith.constant dense<0.000000e+00> : vector<8x128xf32>
    %16 = tpu.matmul %3, %15, %cst_6 {dimension_numbers = #tpu.dot_dimension_numbers<[1], [0], [0], [1], [0, 0, 1, 1], [], []>} : vector<8x24xf32>, vector<24x128xf32>, vector<8x128xf32> -> vector<8x128xf32>
    %cst_7 = arith.constant 0.000000e+00 : f32
    %17 = vector.shape_cast %2 : vector<1x128xi1> to vector<1x128xi1>
    %18 = vector.broadcast %17 : vector<1x128xi1> to vector<8x128xi1>
    %19 = vector.broadcast %cst_7 : f32 to vector<8x128xf32>
    %20 = arith.select %18, %16, %19 : vector<8x128xi1>, vector<8x128xf32>
    %cst_8 = arith.constant dense<0.000000e+00> : vector<8xf32>
    %21 = vector.multi_reduction <add>, %20, %cst_8 [1] : vector<8x128xf32> to vector<8xf32>
    %22 = vector.shape_cast %21 : vector<8xf32> to vector<8x1xf32>
    %23 = arith.mulf %20, %20 : vector<8x128xf32>
    %cst_9 = arith.constant dense<0.000000e+00> : vector<8xf32>
    %24 = vector.multi_reduction <add>, %23, %cst_9 [1] : vector<8x128xf32> to vector<8xf32>
    %25 = vector.shape_cast %24 : vector<8xf32> to vector<8x1xf32>
    %cst_10 = arith.constant 6.250000e-02 : f32
    %26 = vector.broadcast %cst_10 : f32 to vector<8x1xf32>
    %27 = arith.mulf %22, %26 : vector<8x1xf32>
    %cst_11 = arith.constant 6.250000e-02 : f32
    %28 = vector.broadcast %cst_11 : f32 to vector<8x1xf32>
    %29 = arith.mulf %25, %28 : vector<8x1xf32>
    %30 = arith.mulf %27, %27 : vector<8x1xf32>
    %31 = arith.subf %29, %30 : vector<8x1xf32>
    %cst_12 = arith.constant 0.000000e+00 : f32
    %32 = vector.broadcast %cst_12 : f32 to vector<8x1xf32>
    %33 = arith.maximumf %31, %32 : vector<8x1xf32>
    %34 = vector.broadcast %27 : vector<8x1xf32> to vector<8x128xf32>
    %35 = arith.subf %20, %34 : vector<8x128xf32>
    %cst_13 = arith.constant 9.99999974E-6 : f32
    %36 = vector.broadcast %cst_13 : f32 to vector<8x1xf32>
    %37 = arith.addf %33, %36 : vector<8x1xf32>
    %38 = math.rsqrt %37 : vector<8x1xf32>
    %39 = vector.broadcast %38 : vector<8x1xf32> to vector<8x128xf32>
    %40 = arith.mulf %35, %39 : vector<8x128xf32>
    %cst_14 = arith.constant 0.000000e+00 : f32
    %41 = vector.shape_cast %2 : vector<1x128xi1> to vector<1x128xi1>
    %42 = vector.broadcast %41 : vector<1x128xi1> to vector<8x128xi1>
    %43 = vector.broadcast %cst_14 : f32 to vector<8x128xf32>
    %44 = arith.select %42, %40, %43 : vector<8x128xi1>, vector<8x128xf32>
    %cst_15 = arith.constant 0.000000e+00 : f32
    %45 = vector.broadcast %cst_15 : f32 to vector<8x128xf32>
    %46 = arith.cmpf oge, %44, %45 : vector<8x128xf32>
    %cst_16 = arith.constant 2.000000e-01 : f32
    %47 = vector.broadcast %cst_16 : f32 to vector<8x128xf32>
    %48 = arith.mulf %47, %44 : vector<8x128xf32>
    %49 = arith.select %46, %44, %48 : vector<8x128xi1>, vector<8x128xf32>
    %c1_i32_17 = arith.constant 1 : i32
    %50 = tpu.dynamic_rotate %49 by %c1_i32_17 dim 1 : vector<8x128xf32>, i32 -> vector<8x128xf32>
    %c127_i32_18 = arith.constant 127 : i32
    %51 = tpu.dynamic_rotate %49 by %c127_i32_18 dim 1 : vector<8x128xf32>, i32 -> vector<8x128xf32>
    %52 = tpu.concatenate %50, %49, %51 in 0 : vector<8x128xf32>, vector<8x128xf32>, vector<8x128xf32> -> vector<24x128xf32>
    %cst_19 = arith.constant dense<0.000000e+00> : vector<8x128xf32>
    %53 = tpu.matmul %4, %52, %cst_19 {dimension_numbers = #tpu.dot_dimension_numbers<[1], [0], [0], [1], [0, 0, 1, 1], [], []>} : vector<8x24xf32>, vector<24x128xf32>, vector<8x128xf32> -> vector<8x128xf32>
    %cst_20 = arith.constant 0.000000e+00 : f32
    %54 = vector.shape_cast %2 : vector<1x128xi1> to vector<1x128xi1>
    %55 = vector.broadcast %54 : vector<1x128xi1> to vector<8x128xi1>
    %56 = vector.broadcast %cst_20 : f32 to vector<8x128xf32>
    %57 = arith.select %55, %53, %56 : vector<8x128xi1>, vector<8x128xf32>
    %cst_21 = arith.constant dense<0.000000e+00> : vector<8xf32>
    %58 = vector.multi_reduction <add>, %57, %cst_21 [1] : vector<8x128xf32> to vector<8xf32>
    %59 = vector.shape_cast %58 : vector<8xf32> to vector<8x1xf32>
    %60 = arith.mulf %57, %57 : vector<8x128xf32>
    %cst_22 = arith.constant dense<0.000000e+00> : vector<8xf32>
    %61 = vector.multi_reduction <add>, %60, %cst_22 [1] : vector<8x128xf32> to vector<8xf32>
    %62 = vector.shape_cast %61 : vector<8xf32> to vector<8x1xf32>
    %cst_23 = arith.constant 6.250000e-02 : f32
    %63 = vector.broadcast %cst_23 : f32 to vector<8x1xf32>
    %64 = arith.mulf %59, %63 : vector<8x1xf32>
    %cst_24 = arith.constant 6.250000e-02 : f32
    %65 = vector.broadcast %cst_24 : f32 to vector<8x1xf32>
    %66 = arith.mulf %62, %65 : vector<8x1xf32>
    %67 = arith.mulf %64, %64 : vector<8x1xf32>
    %68 = arith.subf %66, %67 : vector<8x1xf32>
    %cst_25 = arith.constant 0.000000e+00 : f32
    %69 = vector.broadcast %cst_25 : f32 to vector<8x1xf32>
    %70 = arith.maximumf %68, %69 : vector<8x1xf32>
    %71 = vector.broadcast %64 : vector<8x1xf32> to vector<8x128xf32>
    %72 = arith.subf %57, %71 : vector<8x128xf32>
    %cst_26 = arith.constant 9.99999974E-6 : f32
    %73 = vector.broadcast %cst_26 : f32 to vector<8x1xf32>
    %74 = arith.addf %70, %73 : vector<8x1xf32>
    %75 = math.rsqrt %74 : vector<8x1xf32>
    %76 = vector.broadcast %75 : vector<8x1xf32> to vector<8x128xf32>
    %77 = arith.mulf %72, %76 : vector<8x128xf32>
    %cst_27 = arith.constant 0.000000e+00 : f32
    %78 = vector.shape_cast %2 : vector<1x128xi1> to vector<1x128xi1>
    %79 = vector.broadcast %78 : vector<1x128xi1> to vector<8x128xi1>
    %80 = vector.broadcast %cst_27 : f32 to vector<8x128xf32>
    %81 = arith.select %79, %77, %80 : vector<8x128xi1>, vector<8x128xf32>
    %82 = arith.addf %7, %81 : vector<8x128xf32>
    %83 = arith.index_cast %c0_i32 : i32 to index
    %c0_28 = arith.constant 0 : index
    %c0_29 = arith.constant 0 : index
    %84 = vector.load %arg4[%83, %c0_28, %c0_29] : memref<1x8x128xf32, #tpu.memory_space<vmem>>, vector<1x8x128xf32>
    %85 = vector.shape_cast %84 : vector<1x8x128xf32> to vector<8x128xf32>
    %86 = vector.shape_cast %82 : vector<8x128xf32> to vector<1x8x128xf32>
    tpu.vector_store %arg4[%83, %c0_28, %c0_29], %86 {strides = array<i32>} : memref<1x8x128xf32, #tpu.memory_space<vmem>>, vector<1x8x128xf32>,
    %c1_i32_30 = arith.constant 1 : i32
    return
  }
  func.func @transform_0(%arg0: i32) -> (i32, i32, i32) {
    %c0_i32 = arith.constant 0 : i32
    %c0_i32_0 = arith.constant 0 : i32
    %c0_i32_1 = arith.constant 0 : i32
    return %arg0, %c0_i32, %c0_i32_0 : i32, i32, i32
  }
  func.func @transform_1(%arg0: i32) -> (i32, i32) {
    %c0_i32 = arith.constant 0 : i32
    %c0_i32_0 = arith.constant 0 : i32
    %c0_i32_1 = arith.constant 0 : i32
    return %c0_i32, %c0_i32_0 : i32, i32
  }
  func.func @transform_2(%arg0: i32) -> (i32, i32) {
    %c0_i32 = arith.constant 0 : i32
    %c0_i32_0 = arith.constant 0 : i32
    %c0_i32_1 = arith.constant 0 : i32
    return %c0_i32, %c0_i32_0 : i32, i32
  }
  func.func @transform_3(%arg0: i32) -> (i32, i32, i32) {
    %c0_i32 = arith.constant 0 : i32
    %c0_i32_0 = arith.constant 0 : i32
    %c0_i32_1 = arith.constant 0 : i32
    return %arg0, %c0_i32, %c0_i32_0 : i32, i32, i32
  }
}

module attributes {stable_mosaic.version = 11 : i64} {
  func.func @_resblock_kernel(%arg0: i32, %arg1: memref<1x8x128xf32, #tpu.memory_space<vmem>>, %arg2: memref<8x24xf32, #tpu.memory_space<vmem>>, %arg3: memref<8x24xf32, #tpu.memory_space<vmem>>, %arg4: memref<1x8x128xf32, #tpu.memory_space<vmem>>) attributes {dimension_semantics = [#tpu.dimension_semantics<parallel>], iteration_bounds = array<i64: 2>, scalar_prefetch = 0 : i64, scratch_operands = 0 : i64, tpu.core_type = #tpu.core_type<tc>, window_params = [{transform_indices = @transform_0, window_bounds = array<i64: 1, 8, 128>}, {pipeline_mode = #tpu.pipeline_mode<synchronous>, transform_indices = @transform_1, window_bounds = array<i64: 8, 24>}, {pipeline_mode = #tpu.pipeline_mode<synchronous>, transform_indices = @transform_2, window_bounds = array<i64: 8, 24>}, {transform_indices = @transform_3, window_bounds = array<i64: 1, 8, 128>}]} {
    %0 = tpu.iota {dimensions = array<i32: 1>} : vector<1x128xi32>
    %c16_i32 = arith.constant 16 : i32
    %1 = vector.broadcast %c16_i32 : i32 to vector<1x128xi32>
    %2 = arith.cmpi slt, %0, %1 : vector<1x128xi32>
    %c0 = arith.constant 0 : index
    %c0_0 = arith.constant 0 : index
    %3 = vector.load %arg2[%c0, %c0_0] : memref<8x24xf32, #tpu.memory_space<vmem>>, vector<8x24xf32>
    %c0_1 = arith.constant 0 : index
    %c0_2 = arith.constant 0 : index
    %4 = vector.load %arg3[%c0_1, %c0_2] : memref<8x24xf32, #tpu.memory_space<vmem>>, vector<8x24xf32>
    %c0_i32 = arith.constant 0 : i32
    %5 = arith.index_cast %c0_i32 : i32 to index
    %c0_3 = arith.constant 0 : index
    %c0_4 = arith.constant 0 : index
    %6 = vector.load %arg1[%5, %c0_3, %c0_4] : memref<1x8x128xf32, #tpu.memory_space<vmem>>, vector<1x8x128xf32>
    %7 = vector.shape_cast %6 : vector<1x8x128xf32> to vector<8x128xf32>
    %cst = arith.constant 0.000000e+00 : f32
    %8 = vector.broadcast %cst : f32 to vector<8x128xf32>
    %9 = arith.cmpf oge, %7, %8 : vector<8x128xf32>
    %cst_5 = arith.constant 2.000000e-01 : f32
    %10 = vector.broadcast %cst_5 : f32 to vector<8x128xf32>
    %11 = arith.mulf %10, %7 : vector<8x128xf32>
    %12 = arith.select %9, %7, %11 : vector<8x128xi1>, vector<8x128xf32>
    %c1_i32 = arith.constant 1 : i32
    %13 = tpu.dynamic_rotate %12 by %c1_i32 dim 1 : vector<8x128xf32>, i32 -> vector<8x128xf32>
    %c127_i32 = arith.constant 127 : i32
    %14 = tpu.dynamic_rotate %12 by %c127_i32 dim 1 : vector<8x128xf32>, i32 -> vector<8x128xf32>
    %15 = tpu.concatenate %13, %12, %14 in 0 : vector<8x128xf32>, vector<8x128xf32>, vector<8x128xf32> -> vector<24x128xf32>
    %cst_6 = arith.constant dense<0.000000e+00> : vector<8x128xf32>
    %16 = tpu.matmul %3, %15, %cst_6 {dimension_numbers = #tpu.dot_dimension_numbers<[1], [0], [0], [1], [0, 0, 1, 1], [], []>} : vector<8x24xf32>, vector<24x128xf32>, vector<8x128xf32> -> vector<8x128xf32>
    %cst_7 = arith.constant 0.000000e+00 : f32
    %17 = vector.shape_cast %2 : vector<1x128xi1> to vector<1x128xi1>
    %18 = vector.broadcast %17 : vector<1x128xi1> to vector<8x128xi1>
    %19 = vector.broadcast %cst_7 : f32 to vector<8x128xf32>
    %20 = arith.select %18, %16, %19 : vector<8x128xi1>, vector<8x128xf32>
    %cst_8 = arith.constant dense<0.000000e+00> : vector<8xf32>
    %21 = vector.multi_reduction <add>, %20, %cst_8 [1] : vector<8x128xf32> to vector<8xf32>
    %22 = vector.shape_cast %21 : vector<8xf32> to vector<8x1xf32>
    %23 = arith.mulf %20, %20 : vector<8x128xf32>
    %cst_9 = arith.constant dense<0.000000e+00> : vector<8xf32>
    %24 = vector.multi_reduction <add>, %23, %cst_9 [1] : vector<8x128xf32> to vector<8xf32>
    %25 = vector.shape_cast %24 : vector<8xf32> to vector<8x1xf32>
    %cst_10 = arith.constant 6.250000e-02 : f32
    %26 = vector.broadcast %cst_10 : f32 to vector<8x1xf32>
    %27 = arith.mulf %22, %26 : vector<8x1xf32>
    %cst_11 = arith.constant 6.250000e-02 : f32
    %28 = vector.broadcast %cst_11 : f32 to vector<8x1xf32>
    %29 = arith.mulf %25, %28 : vector<8x1xf32>
    %30 = arith.mulf %27, %27 : vector<8x1xf32>
    %31 = arith.subf %29, %30 : vector<8x1xf32>
    %cst_12 = arith.constant 0.000000e+00 : f32
    %32 = vector.broadcast %cst_12 : f32 to vector<8x1xf32>
    %33 = arith.maximumf %31, %32 : vector<8x1xf32>
    %34 = vector.broadcast %27 : vector<8x1xf32> to vector<8x128xf32>
    %35 = arith.subf %20, %34 : vector<8x128xf32>
    %cst_13 = arith.constant 9.99999974E-6 : f32
    %36 = vector.broadcast %cst_13 : f32 to vector<8x1xf32>
    %37 = arith.addf %33, %36 : vector<8x1xf32>
    %38 = math.rsqrt %37 : vector<8x1xf32>
    %39 = vector.broadcast %38 : vector<8x1xf32> to vector<8x128xf32>
    %40 = arith.mulf %35, %39 : vector<8x128xf32>
    %cst_14 = arith.constant 0.000000e+00 : f32
    %41 = vector.shape_cast %2 : vector<1x128xi1> to vector<1x128xi1>
    %42 = vector.broadcast %41 : vector<1x128xi1> to vector<8x128xi1>
    %43 = vector.broadcast %cst_14 : f32 to vector<8x128xf32>
    %44 = arith.select %42, %40, %43 : vector<8x128xi1>, vector<8x128xf32>
    %cst_15 = arith.constant 0.000000e+00 : f32
    %45 = vector.broadcast %cst_15 : f32 to vector<8x128xf32>
    %46 = arith.cmpf oge, %44, %45 : vector<8x128xf32>
    %cst_16 = arith.constant 2.000000e-01 : f32
    %47 = vector.broadcast %cst_16 : f32 to vector<8x128xf32>
    %48 = arith.mulf %47, %44 : vector<8x128xf32>
    %49 = arith.select %46, %44, %48 : vector<8x128xi1>, vector<8x128xf32>
    %c1_i32_17 = arith.constant 1 : i32
    %50 = tpu.dynamic_rotate %49 by %c1_i32_17 dim 1 : vector<8x128xf32>, i32 -> vector<8x128xf32>
    %c127_i32_18 = arith.constant 127 : i32
    %51 = tpu.dynamic_rotate %49 by %c127_i32_18 dim 1 : vector<8x128xf32>, i32 -> vector<8x128xf32>
    %52 = tpu.concatenate %50, %49, %51 in 0 : vector<8x128xf32>, vector<8x128xf32>, vector<8x128xf32> -> vector<24x128xf32>
    %cst_19 = arith.constant dense<0.000000e+00> : vector<8x128xf32>
    %53 = tpu.matmul %4, %52, %cst_19 {dimension_numbers = #tpu.dot_dimension_numbers<[1], [0], [0], [1], [0, 0, 1, 1], [], []>} : vector<8x24xf32>, vector<24x128xf32>, vector<8x128xf32> -> vector<8x128xf32>
    %cst_20 = arith.constant 0.000000e+00 : f32
    %54 = vector.shape_cast %2 : vector<1x128xi1> to vector<1x128xi1>
    %55 = vector.broadcast %54 : vector<1x128xi1> to vector<8x128xi1>
    %56 = vector.broadcast %cst_20 : f32 to vector<8x128xf32>
    %57 = arith.select %55, %53, %56 : vector<8x128xi1>, vector<8x128xf32>
    %cst_21 = arith.constant dense<0.000000e+00> : vector<8xf32>
    %58 = vector.multi_reduction <add>, %57, %cst_21 [1] : vector<8x128xf32> to vector<8xf32>
    %59 = vector.shape_cast %58 : vector<8xf32> to vector<8x1xf32>
    %60 = arith.mulf %57, %57 : vector<8x128xf32>
    %cst_22 = arith.constant dense<0.000000e+00> : vector<8xf32>
    %61 = vector.multi_reduction <add>, %60, %cst_22 [1] : vector<8x128xf32> to vector<8xf32>
    %62 = vector.shape_cast %61 : vector<8xf32> to vector<8x1xf32>
    %cst_23 = arith.constant 6.250000e-02 : f32
    %63 = vector.broadcast %cst_23 : f32 to vector<8x1xf32>
    %64 = arith.mulf %59, %63 : vector<8x1xf32>
    %cst_24 = arith.constant 6.250000e-02 : f32
    %65 = vector.broadcast %cst_24 : f32 to vector<8x1xf32>
    %66 = arith.mulf %62, %65 : vector<8x1xf32>
    %67 = arith.mulf %64, %64 : vector<8x1xf32>
    %68 = arith.subf %66, %67 : vector<8x1xf32>
    %cst_25 = arith.constant 0.000000e+00 : f32
    %69 = vector.broadcast %cst_25 : f32 to vector<8x1xf32>
    %70 = arith.maximumf %68, %69 : vector<8x1xf32>
    %71 = vector.broadcast %64 : vector<8x1xf32> to vector<8x128xf32>
    %72 = arith.subf %57, %71 : vector<8x128xf32>
    %cst_26 = arith.constant 9.99999974E-6 : f32
    %73 = vector.broadcast %cst_26 : f32 to vector<8x1xf32>
    %74 = arith.addf %70, %73 : vector<8x1xf32>
    %75 = math.rsqrt %74 : vector<8x1xf32>
    %76 = vector.broadcast %75 : vector<8x1xf32> to vector<8x128xf32>
    %77 = arith.mulf %72, %76 : vector<8x128xf32>
    %cst_27 = arith.constant 0.000000e+00 : f32
    %78 = vector.shape_cast %2 : vector<1x128xi1> to vector<1x128xi1>
    %79 = vector.broadcast %78 : vector<1x128xi1> to vector<8x128xi1>
    %80 = vector.broadcast %cst_27 : f32 to vector<8x128xf32>
    %81 = arith.select %79, %77, %80 : vector<8x128xi1>, vector<8x128xf32>
    %82 = arith.addf %7, %81 : vector<8x128xf32>
    %83 = arith.index_cast %c0_i32 : i32 to index
    %c0_28 = arith.constant 0 : index
    %c0_29 = arith.constant 0 : index
    %84 = vector.load %arg4[%83, %c0_28, %c0_29] : memref<1x8x128xf32, #tpu.memory_space<vmem>>, vector<1x8x128xf32>
    %85 = vector.shape_cast %84 : vector<1x8x128xf32> to vector<8x128xf32>
    %86 = vector.shape_cast %82 : vector<8x128xf32> to vector<1x8x128xf32>
    tpu.vector_store %arg4[%83, %c0_28, %c0_29], %86 {strides = array<i32>} : memref<1x8x128xf32, #tpu.memory_space<vmem>>, vector<1x8x128xf32>,
    %c1_i32_30 = arith.constant 1 : i32
    return
  }
  func.func @transform_0(%arg0: i32) -> (i32, i32, i32) {
    %c0_i32 = arith.constant 0 : i32
    %c0_i32_0 = arith.constant 0 : i32
    %c0_i32_1 = arith.constant 0 : i32
    return %arg0, %c0_i32, %c0_i32_0 : i32, i32, i32
  }
  func.func @transform_1(%arg0: i32) -> (i32, i32) {
    %c0_i32 = arith.constant 0 : i32
    %c0_i32_0 = arith.constant 0 : i32
    %c0_i32_1 = arith.constant 0 : i32
    return %c0_i32, %c0_i32_0 : i32, i32
  }
  func.func @transform_2(%arg0: i32) -> (i32, i32) {
    %c0_i32 = arith.constant 0 : i32
    %c0_i32_0 = arith.constant 0 : i32
    %c0_i32_1 = arith.constant 0 : i32
    return %c0_i32, %c0_i32_0 : i32, i32
  }
  func.func @transform_3(%arg0: i32) -> (i32, i32, i32) {
    %c0_i32 = arith.constant 0 : i32
    %c0_i32_0 = arith.constant 0 : i32
    %c0_i32_1 = arith.constant 0 : i32
    return %arg0, %c0_i32, %c0_i32_0 : i32, i32, i32
  }
}

</mosaic_0001>

<llo_original>
// kernel: tpu_custom_call.1
$region0: #{tpu_custom_call.1}
  #allocation0 [shape = 'u32[]', space=smem, size = 0x4, offset = 0x4, fixed_abs, tag = 'smem constant byte address 0x4 - core index']
  #allocation1 [shape = 'u32[144,128]{1,0:T(1,128)}', space=vmem, size = 0x12000, scoped, tag = 'internal scratch']
  %s0 = inlined_call_operand.hbm [shape: f32[2,8,128], index: 0, kind: input, shape index: {}]
  %s1 = inlined_call_operand.hbm [shape: f32[8,24], index: 1, kind: input, shape index: {}]
  %s2 = inlined_call_operand.hbm [shape: f32[8,24], index: 2, kind: input, shape index: {}]
  %s3 = inlined_call_operand.hbm [shape: f32[2,8,128], index: 3, kind: output, shape index: {}]
  %s4 = sld [smem:[#allocation0]]
  $region57: #{tpu_custom_call.1} parent=0
    _
  %s6 = ssub.s32 1, %s4
  %s7 = scalar_select 0, %s6, %s4
  $region1: #{tpu_custom_call.1} parent=0
    #allocation2 [shape = 'u8[8192]{0}', space=vmem, size = 0x2000, scoped, tag = 'input window, operand 0']
    #allocation3 [shape = 's32[2]{0}', space=sflag, size = 0x8, scoped, tag = 'scoped memory for tpu_custom_call.1']
    #allocation4 [shape = 's32[2]{0}', space=sflag, size = 0x8, scoped, tag = 'scoped memory for tpu_custom_call.1']
    #allocation5 [shape = 'u8[4096]{0}', space=vmem, size = 0x1000, scoped, tag = 'input window, operand 1, single buffered']
    #allocation6 [shape = 's32[1]{0}', space=sflag, size = 0x4, scoped, tag = 'scoped memory for tpu_custom_call.1']
    #allocation7 [shape = 'u8[4096]{0}', space=vmem, size = 0x1000, scoped, tag = 'input window, operand 2, single buffered']
    #allocation8 [shape = 'u8[8192]{0}', space=vmem, size = 0x2000, scoped, tag = 'output window, operand 0']
    %8 = vsyncpa [#allocation3], 0
    %s9 = scalar_lea.sflag [#allocation3], 1
    %10 = vsyncpa %s9, 0
    %11 = vsyncpa [#allocation6], 0
    %12 = vsyncpa [#allocation4], 0
    %s13 = scalar_lea.sflag [#allocation4], 1
    %14 = vsyncpa %s13, 0
    loop: start=0, step=1, limit=4
    $region2: #{tpu_custom_call.1} parent=1 // loop_pre_header
      _
    $region3: #{tpu_custom_call.1} parent=1 // loop_header
      %s16 = sphi 0, %s20
      %p17 = scmp.ge.s32.totalorder %s16, 4
      %s26 = sphi 0, %s28
      %s29 = sphi 0, %s26
      %s30 = sphi 0, %s29
      %s46 = sphi 0, %s30
      %s50 = sphi 0, %s50
      %s52 = sphi 0, %s50
      %s53 = sphi 0, %s52
      %s67 = sphi 0, %s53
      %s71 = sphi 0, %s71
      %s73 = sphi 0, %s71
      %s74 = sphi 0, %s73
      %s88 = sphi 0, %s74
      %s94 = sphi 0, %s96
      %s97 = sphi 0, %s94
      %s98 = sphi 0, %s97
      %s114 = sphi 0, %s98
    $region4: #{tpu_custom_call.1} parent=1 // loop_header_branch
      %19 = sbr.rel (%p17) target = $region8
    $region5: #{tpu_custom_call.1} parent=1 // loop_body
      %s21 = ssub.s32 %s16, 1
      %s22 = ssub.s32 %s16, 2
      %s23 = sadd.s32 %s16, 1
      %s24 = ssub.s32 %s16, %s23
      %p25 = scmp.eq.s32.totalorder %s24, 0
      %s27 = sadd.s32 %s26, 1
      %s28 = scalar_select %p25, %s26, %s27
      %p31 = pneg %p25
      %p32 = scmp.eq.s32.totalorder %s16, 1
      %p33 = por %p31, %p32
      %p34 = scmp.ne.s32.totalorder %s26, %s29
      %p35 = scmp.eq.s32.totalorder %s16, 0
      %p36 = por %p34, %p35
      %p37 = scmp.ne.s32.totalorder %s26, %s29
      %p38 = scmp.eq.s32.totalorder %s21, 1
      %p39 = por %p37, %p38
      %p40 = scmp.ne.s32.totalorder %s29, %s30
      %p41 = scmp.eq.s32.totalorder %s21, 0
      %p42 = por %p40, %p41
      %p43 = scmp.ne.s32.totalorder %s29, %s30
      %p44 = scmp.eq.s32.totalorder %s22, 1
      %p45 = por %p43, %p44
      %p47 = scmp.ne.s32.totalorder %s30, %s46
      %p48 = scmp.eq.s32.totalorder %s22, 0
      %p49 = por %p47, %p48
      %s51 = sadd.s32 %s50, 1
      %p54 = scmp.eq.s32.totalorder %s16, 1
      %p55 = scmp.ne.s32.totalorder %s50, %s52
      %p56 = scmp.eq.s32.totalorder %s16, 0
      %p57 = por %p55, %p56
      %p58 = scmp.ne.s32.totalorder %s50, %s52
      %p59 = scmp.eq.s32.totalorder %s21, 1
      %p60 = por %p58, %p59
      %p61 = scmp.ne.s32.totalorder %s52, %s53
      %p62 = scmp.eq.s32.totalorder %s21, 0
      %p63 = por %p61, %p62
      %p64 = scmp.ne.s32.totalorder %s52, %s53
      %p65 = scmp.eq.s32.totalorder %s22, 1
      %p66 = por %p64, %p65
      %p68 = scmp.ne.s32.totalorder %s53, %s67
      %p69 = scmp.eq.s32.totalorder %s22, 0
      %p70 = por %p68, %p69
      %s72 = sadd.s32 %s71, 1
      %p75 = scmp.eq.s32.totalorder %s16, 1
      %p76 = scmp.ne.s32.totalorder %s71, %s73
      %p77 = scmp.eq.s32.totalorder %s16, 0
      %p78 = por %p76, %p77
      %p79 = scmp.ne.s32.totalorder %s71, %s73
      %p80 = scmp.eq.s32.totalorder %s21, 1
      %p81 = por %p79, %p80
      %p82 = scmp.ne.s32.totalorder %s73, %s74
      %p83 = scmp.eq.s32.totalorder %s21, 0
      %p84 = por %p82, %p83
      %p85 = scmp.ne.s32.totalorder %s73, %s74
      %p86 = scmp.eq.s32.totalorder %s22, 1
      %p87 = por %p85, %p86
      %p89 = scmp.ne.s32.totalorder %s74, %s88
      %p90 = scmp.eq.s32.totalorder %s22, 0
      %p91 = por %p89, %p90
      %s92 = ssub.s32 %s16, %s23
      %p93 = scmp.eq.s32.totalorder %s92, 0
      %s95 = sadd.s32 %s94, 1
      %s96 = scalar_select %p93, %s94, %s95
      %p99 = pneg %p93
      %p100 = scmp.eq.s32.totalorder %s16, 1
      %p101 = por %p99, %p100
      %p102 = scmp.ne.s32.totalorder %s94, %s97
      %p103 = scmp.eq.s32.totalorder %s16, 0
      %p104 = por %p102, %p103
      %p105 = scmp.ne.s32.totalorder %s94, %s97
      %p106 = scmp.eq.s32.totalorder %s21, 1
      %p107 = por %p105, %p106
      %p108 = scmp.ne.s32.totalorder %s97, %s98
      %p109 = scmp.eq.s32.totalorder %s21, 0
      %p110 = por %p108, %p109
      %p111 = scmp.ne.s32.totalorder %s97, %s98
      %p112 = scmp.eq.s32.totalorder %s22, 1
      %p113 = por %p111, %p112
      %p115 = scmp.ne.s32.totalorder %s98, %s114
      %p116 = scmp.eq.s32.totalorder %s22, 0
      %p117 = por %p115, %p116
      %p118 = scmp.le.s32.totalorder 1, %s16
      %p119 = scmp.lt.s32.totalorder %s16, 3
      %p120 = pnand %p118, %p119
      %p121 = pneg %p120
      // Predicated region
      $region9: #{tpu_custom_call.1} parent=5 // pred_check
        _
      $region10: #{tpu_custom_call.1} parent=5 // pred_check_branch
        %123 = sbr.rel (%p120) target = $region12
      $region11: #{tpu_custom_call.1} parent=5 // pred_region
        %s124 = ssub.s32 %s16, 1
        // Predicated region
        $region13: #{tpu_custom_call.1} parent=11 // pred_check
          %p125 = pneg %p63
        $region14: #{tpu_custom_call.1} parent=11 // pred_check_branch
          %127 = sbr.rel (%p125) target = $region16
        $region15: #{tpu_custom_call.1} parent=11 // pred_region
          %s129 = ssub.s32 128, 128
          %130 = vsyncadd [#allocation6], %s129
          %s132 = sshll.u32 [#allocation5], 4
          %s133 = int_to_ptr.vmem [resolvable:$true] %s132
          %135 = dma.hbm_to_vmem [thread:$0]  %s1, 128, %s133, [#allocation6]
        $region16: #{tpu_custom_call.1} parent=11 // pred_fallthru
          _
        // Predicated region
        $region17: #{tpu_custom_call.1} parent=11 // pred_check
          %p136 = pneg %p84
        $region18: #{tpu_custom_call.1} parent=11 // pred_check_branch
          %138 = sbr.rel (%p136) target = $region20
        $region19: #{tpu_custom_call.1} parent=11 // pred_region
          %s140 = ssub.s32 128, 128
          %141 = vsyncadd [#allocation6], %s140
          %s143 = sshll.u32 [#allocation7], 4
          %s144 = int_to_ptr.vmem [resolvable:$true] %s143
          %146 = dma.hbm_to_vmem [thread:$0]  %s2, 128, %s144, [#allocation6]
        $region20: #{tpu_custom_call.1} parent=11 // pred_fallthru
          _
      $region12: #{tpu_custom_call.1} parent=5 // pred_fallthru
        _
      %p147 = scmp.lt.s32.totalorder %s16, 2
      // Predicated region
      $region21: #{tpu_custom_call.1} parent=5 // pred_check
        %p148 = pneg %p147
      $region22: #{tpu_custom_call.1} parent=5 // pred_check_branch
        %150 = sbr.rel (%p148) target = $region24
      $region23: #{tpu_custom_call.1} parent=5 // pred_region
        // Predicated region
        $region25: #{tpu_custom_call.1} parent=23 // pred_check
          %p151 = pneg %p36
        $region26: #{tpu_custom_call.1} parent=23 // pred_check_branch
          %153 = sbr.rel (%p151) target = $region28
        $region27: #{tpu_custom_call.1} parent=23 // pred_region
          %s154 = sand.u32 %s26, 1
          %s155 = scalar_lea.sflag [#allocation3], %s154
          %s156 = sand.u32 %s26, 1
          %s157 = smul.addr %s156, 8
          %s158 = scalar_lea.vmem [#allocation2], %s157
          %s160 = ssub.s32 128, 128
          %161 = vsyncadd %s155, %s160
          %s162 = smul.addr %s16, 128
          %s163 = scalar_lea.hbm %s0, %s162
          %s165 = sshll.u32 %s158, 4
          %s166 = int_to_ptr.vmem [resolvable:$true] %s165
          %168 = dma.hbm_to_vmem [thread:$0]  %s163, 128, %s166, %s155
        $region28: #{tpu_custom_call.1} parent=23 // pred_fallthru
          _
      $region24: #{tpu_custom_call.1} parent=5 // pred_fallthru
        _
      %p169 = scmp.le.s32.totalorder 1, %s16
      %p170 = scmp.lt.s32.totalorder %s16, 3
      %p171 = pnand %p169, %p170
      %p172 = pneg %p171
      // Predicated region
      $region29: #{tpu_custom_call.1} parent=5 // pred_check
        _
      $region30: #{tpu_custom_call.1} parent=5 // pred_check_branch
        %174 = sbr.rel (%p171) target = $region32
      $region31: #{tpu_custom_call.1} parent=5 // pred_region
        %s175 = ssub.s32 %s16, 1
        %s176 = sand.u32 %s29, 1
        %s177 = scalar_lea.sflag [#allocation3], %s176
        %s178 = sand.u32 %s29, 1
        %s179 = smul.addr %s178, 8
        %s180 = scalar_lea.vmem [#allocation2], %s179
        // Predicated region
        $region33: #{tpu_custom_call.1} parent=31 // pred_check
          %p181 = pneg %p42
        $region34: #{tpu_custom_call.1} parent=31 // pred_check_branch
          %183 = sbr.rel (%p181) target = $region36
        $region35: #{tpu_custom_call.1} parent=31 // pred_region
          %184 = dma.done %s177, 128
        $region36: #{tpu_custom_call.1} parent=31 // pred_fallthru
          _
        // Predicated region
        $region37: #{tpu_custom_call.1} parent=31 // pred_check
          %p185 = pneg %p63
        $region38: #{tpu_custom_call.1} parent=31 // pred_check_branch
          %187 = sbr.rel (%p185) target = $region40
        $region39: #{tpu_custom_call.1} parent=31 // pred_region
          %188 = dma.done [#allocation6], 128
        $region40: #{tpu_custom_call.1} parent=31 // pred_fallthru
          _
        // Predicated region
        $region41: #{tpu_custom_call.1} parent=31 // pred_check
          %p189 = pneg %p84
        $region42: #{tpu_custom_call.1} parent=31 // pred_check_branch
          %191 = sbr.rel (%p189) target = $region44
        $region43: #{tpu_custom_call.1} parent=31 // pred_region
          %192 = dma.done [#allocation6], 128
        $region44: #{tpu_custom_call.1} parent=31 // pred_fallthru
          _
        %s193 = sand.u32 %s29, 1
        %s194 = scalar_lea.sflag [#allocation3], %s193
        %s195 = sand.u32 %s29, 1
        %s196 = smul.addr %s195, 8
        %s197 = scalar_lea.vmem [#allocation2], %s196
        %p198 = pneg %p42
        %p199 = pneg %p39
        %p200 = pneg %p63
        %p201 = pneg %p60
        %p202 = pneg %p84
        %p203 = pneg %p81
        %p204 = pneg %p110
        %p205 = pneg %p107
        %s206 = sand.u32 %s97, 1
        %s207 = scalar_lea.sflag [#allocation4], %s206
        %s208 = sand.u32 %s97, 1
        %s209 = smul.addr %s208, 8
        %s210 = scalar_lea.vmem [#allocation8], %s209
        %v211 = vlaneseq
        %v212 = vand.u32 %v211, 127
        %vm213 = vcmp.lt.s32.totalorder %v212, 16
        %v214 = vld [vmem:[#allocation5] sm:$0xff]
        %v215 = vld [vmem:[#allocation7] sm:$0xff]
        %v216 = vld [vmem:[%s180] sm:$0xff]
        %vm217 = vcmp.ge.f32.partialorder %v216, 0.0
        %v218 = vmul.f32 %v216, 0.2
        %v219 = vsel %vm217, %v216, %v218
        %220 = vrot.lane.b32.xlu0 %v219, 1
        %v221 = vpop.permute.xlu0 %220
        %222 = vrot.lane.b32.xlu0 %v219, 127
        %v223 = vpop.permute.xlu0 %222
        %vm224 = vcmask 195584
        %v226 = vsel %vm224, %v214, 0
        %228 = vmatprep.subr.mxu0 0.0
        %229 = vmatpush1.msra.mxu0 %v221
        %230 = vmatprep.subr.mxu0 0.0
        %231 = vmatpush1.msra.mxu0 %v219
        %232 = vmatprep.subr.mxu0 0.0
        %233 = vmatpush1.msra.mxu0 %v223
        %234 = vmatprep.subr.mxu0 0.0
        %235 = vmatpush1.msra.mxu0 0.0
        %236 = vmatprep.subr.mxu0 0.0
        %237 = vmatpush1.msra.mxu0 0.0
        %238 = vmatprep.subr.mxu0 0.0
        %239 = vmatpush1.msra.mxu0 0.0
        %240 = vmatprep.subr.mxu0 0.0
        %241 = vmatpush1.msra.mxu0 0.0
        %242 = vmatprep.subr.mxu0 0.0
        %243 = vmatpush1.msra.mxu0 0.0
        %244 = vmatprep.subr.mxu0 0.0
        %245 = vmatpush1.msra.mxu0 0.0
        %246 = vmatprep.subr.mxu0 0.0
        %247 = vmatpush1.msra.mxu0 0.0
        %248 = vmatprep.subr.mxu0 0.0
        %249 = vmatpush1.msra.mxu0 0.0
        %250 = vmatprep.subr.mxu0 0.0
        %251 = vmatpush1.msra.mxu0 0.0
        %252 = vmatprep.subr.mxu0 0.0
        %253 = vmatpush1.msra.mxu0 0.0
        %254 = vmatprep.subr.mxu0 0.0
        %255 = vmatpush1.msra.mxu0 0.0
        %256 = vmatprep.subr.mxu0 0.0
        %257 = vmatpush1.msra.mxu0 0.0
        %258 = vmatprep.subr.mxu0 0.0
        %259 = vmatpush1.msra.mxu0 0.0
        %260 = vmatprep.subr.mxu0 0.0
        %261 = vmatpush1.msra.mxu0 0.0
        %262 = vmatprep.subr.mxu0 0.0
        %263 = vmatpush1.msra.mxu0 0.0
        %264 = vmatprep.subr.mxu0 0.0
        %265 = vmatpush1.msra.mxu0 0.0
        %266 = vmatprep.subr.mxu0 0.0
        %267 = vmatpush1.msra.mxu0 0.0
        %268 = vmatprep.subr.mxu0 0.0
        %269 = vmatpush1.msra.mxu0 0.0
        %270 = vmatprep.subr.mxu0 0.0
        %271 = vmatpush1.msra.mxu0 0.0
        %272 = vmatprep.subr.mxu0 0.0
        %273 = vmatpush1.msra.mxu0 0.0
        %274 = vmatprep.subr.mxu0 0.0
        %275 = vmatpush1.msra.mxu0 0.0
        %276 = vmatprep.subr.mxu0 0.0
        %277 = vmatpush1.msra.mxu0 0.0
        %278 = vmatprep.subr.mxu0 0.0
        %279 = vmatpush1.msra.mxu0 0.0
        %280 = vmatprep.subr.mxu0 0.0
        %281 = vmatpush1.msra.mxu0 0.0
        %282 = vmatprep.subr.mxu0 0.0
        %283 = vmatpush1.msra.mxu0 0.0
        %284 = vmatprep.subr.mxu0 0.0
        %285 = vmatpush1.msra.mxu0 0.0
        %286 = vmatprep.subr.mxu0 0.0
        %287 = vmatpush1.msra.mxu0 0.0
        %288 = vmatprep.subr.mxu0 0.0
        %289 = vmatpush1.msra.mxu0 0.0
        %290 = vmatprep.subr.mxu0 0.0
        %291 = vmatpush1.msra.mxu0 0.0
        %292 = vmatprep.mubr.f32.mxu0 0.0
        %293 = vmatmul.mubr.f32.gmra.mrb[0].mxu0 %v226
        %v294 = vpop.f32.mrb[0].mxu0
        %v295 = vadd.f32 0.0, %v294
        %v296 = vpop.f32.mrb[0].mxu0
        %297 = vdwg.mxu0
        %v298 = vsel %vm213, 1, 0
        %vm299 = vcmp.eq.s32.totalorder %v298, 1
        %v300 = vsel %vm299, %v295, 0.0
        %301 = vadd.xlane.f32.xlu0 %v300
        %v302 = vpop.xlane.xlu0 %301
        %v303 = vmul.f32 %v300, %v300
        %304 = vadd.xlane.f32.xlu0 %v303
        %v305 = vpop.xlane.xlu0 %304
        %v306 = vmul.f32 %v302, 0.0625
        %v307 = vmul.f32 %v305, 0.0625
        %v308 = vmul.f32 %v306, %v306
        %v309 = vsub.f32 %v307, %v308
        %v310 = vmax.f32 %v309, 0.0
        %v311 = vsub.f32 %v300, %v306
        %v312 = vadd.f32 %v310, 1e-05
        %v313 = vrsqrt.pop %v312
        %v314 = vmul.f32 %v311, %v313
        %v315 = vsel %vm299, %v314, 0.0
        %vm316 = vcmp.ge.f32.partialorder %v315, 0.0
        %v317 = vmul.f32 %v315, 0.2
        %v318 = vsel %vm316, %v315, %v317
        %319 = vrot.lane.b32.xlu0 %v318, 1
        %v320 = vpop.permute.xlu0 %319
        %321 = vrot.lane.b32.xlu0 %v318, 127
        %v322 = vpop.permute.xlu0 %321
        %v324 = vsel %vm224, %v215, 0
        %326 = vmatprep.subr.mxu0 0.0
        %327 = vmatpush1.msra.mxu0 %v320
        %328 = vmatprep.subr.mxu0 0.0
        %329 = vmatpush1.msra.mxu0 %v318
        %330 = vmatprep.subr.mxu0 0.0
        %331 = vmatpush1.msra.mxu0 %v322
        %332 = vmatprep.subr.mxu0 0.0
        %333 = vmatpush1.msra.mxu0 0.0
        %334 = vmatprep.subr.mxu0 0.0
        %335 = vmatpush1.msra.mxu0 0.0
        %336 = vmatprep.subr.mxu0 0.0
        %337 = vmatpush1.msra.mxu0 0.0
        %338 = vmatprep.subr.mxu0 0.0
        %339 = vmatpush1.msra.mxu0 0.0
        %340 = vmatprep.subr.mxu0 0.0
        %341 = vmatpush1.msra.mxu0 0.0
        %342 = vmatprep.subr.mxu0 0.0
        %343 = vmatpush1.msra.mxu0 0.0
        %344 = vmatprep.subr.mxu0 0.0
        %345 = vmatpush1.msra.mxu0 0.0
        %346 = vmatprep.subr.mxu0 0.0
        %347 = vmatpush1.msra.mxu0 0.0
        %348 = vmatprep.subr.mxu0 0.0
        %349 = vmatpush1.msra.mxu0 0.0
        %350 = vmatprep.subr.mxu0 0.0
        %351 = vmatpush1.msra.mxu0 0.0
        %352 = vmatprep.subr.mxu0 0.0
        %353 = vmatpush1.msra.mxu0 0.0
        %354 = vmatprep.subr.mxu0 0.0
        %355 = vmatpush1.msra.mxu0 0.0
        %356 = vmatprep.subr.mxu0 0.0
        %357 = vmatpush1.msra.mxu0 0.0
        %358 = vmatprep.subr.mxu0 0.0
        %359 = vmatpush1.msra.mxu0 0.0
        %360 = vmatprep.subr.mxu0 0.0
        %361 = vmatpush1.msra.mxu0 0.0
        %362 = vmatprep.subr.mxu0 0.0
        %363 = vmatpush1.msra.mxu0 0.0
        %364 = vmatprep.subr.mxu0 0.0
        %365 = vmatpush1.msra.mxu0 0.0
        %366 = vmatprep.subr.mxu0 0.0
        %367 = vmatpush1.msra.mxu0 0.0
        %368 = vmatprep.subr.mxu0 0.0
        %369 = vmatpush1.msra.mxu0 0.0
        %370 = vmatprep.subr.mxu0 0.0
        %371 = vmatpush1.msra.mxu0 0.0
        %372 = vmatprep.subr.mxu0 0.0
        %373 = vmatpush1.msra.mxu0 0.0
        %374 = vmatprep.subr.mxu0 0.0
        %375 = vmatpush1.msra.mxu0 0.0
        %376 = vmatprep.subr.mxu0 0.0
        %377 = vmatpush1.msra.mxu0 0.0
        %378 = vmatprep.subr.mxu0 0.0
        %379 = vmatpush1.msra.mxu0 0.0
        %380 = vmatprep.subr.mxu0 0.0
        %381 = vmatpush1.msra.mxu0 0.0
        %382 = vmatprep.subr.mxu0 0.0
        %383 = vmatpush1.msra.mxu0 0.0
        %384 = vmatprep.subr.mxu0 0.0
        %385 = vmatpush1.msra.mxu0 0.0
        %386 = vmatprep.subr.mxu0 0.0
        %387 = vmatpush1.msra.mxu0 0.0
        %388 = vmatprep.subr.mxu0 0.0
        %389 = vmatpush1.msra.mxu0 0.0
        %390 = vmatprep.mubr.f32.mxu0 0.0
        %391 = vmatmul.mubr.f32.gmra.mrb[0].mxu0 %v324
        %v392 = vpop.f32.mrb[0].mxu0
        %v393 = vadd.f32 0.0, %v392
        %v394 = vpop.f32.mrb[0].mxu0
        %395 = vdwg.mxu0
        %v396 = vsel %vm299, %v393, 0.0
        %397 = vadd.xlane.f32.xlu0 %v396
        %v398 = vpop.xlane.xlu0 %397
        %v399 = vmul.f32 %v396, %v396
        %400 = vadd.xlane.f32.xlu0 %v399
        %v401 = vpop.xlane.xlu0 %400
        %v402 = vmul.f32 %v398, 0.0625
        %v403 = vmul.f32 %v401, 0.0625
        %v404 = vmul.f32 %v402, %v402
        %v405 = vsub.f32 %v403, %v404
        %v406 = vmax.f32 %v405, 0.0
        %v407 = vsub.f32 %v396, %v402
        %v408 = vadd.f32 %v406, 1e-05
        %v409 = vrsqrt.pop %v408
        %v410 = vmul.f32 %v407, %v409
        %v411 = vsel %vm299, %v410, 0.0
        %v412 = vadd.f32 %v216, %v411
        %413 = vst [vmem:[%s210] sm:$0xff] %v412
        %s414 = sand.u32 %s97, 1
        %s415 = scalar_lea.sflag [#allocation4], %s414
        %s416 = sand.u32 %s97, 1
        %s417 = smul.addr %s416, 8
        %s418 = scalar_lea.vmem [#allocation8], %s417
        // Predicated region
        $region45: #{tpu_custom_call.1} parent=31 // pred_check
          %p419 = pneg %p107
        $region46: #{tpu_custom_call.1} parent=31 // pred_check_branch
          %421 = sbr.rel (%p419) target = $region48
        $region47: #{tpu_custom_call.1} parent=31 // pred_region
          %s423 = ssub.s32 128, 128
          %424 = vsyncadd %s415, %s423
          %s425 = smul.addr %s21, 128
          %s426 = scalar_lea.hbm %s3, %s425
          %s428 = sshll.u32 %s418, 4
          %s429 = int_to_ptr.vmem [resolvable:$true] %s428
          %431 = dma.vmem_to_hbm [thread:$0]  %s429, 128, %s426, %s415
        $region48: #{tpu_custom_call.1} parent=31 // pred_fallthru
          _
      $region32: #{tpu_custom_call.1} parent=5 // pred_fallthru
        _
      %p432 = scmp.le.s32.totalorder 2, %s16
      // Predicated region
      $region49: #{tpu_custom_call.1} parent=5 // pred_check
        %p433 = pneg %p432
      $region50: #{tpu_custom_call.1} parent=5 // pred_check_branch
        %435 = sbr.rel (%p433) target = $region52
      $region51: #{tpu_custom_call.1} parent=5 // pred_region
        %s436 = ssub.s32 %s16, 2
        // Predicated region
        $region53: #{tpu_custom_call.1} parent=51 // pred_check
          %p437 = pneg %p113
        $region54: #{tpu_custom_call.1} parent=51 // pred_check_branch
          %439 = sbr.rel (%p437) target = $region56
        $region55: #{tpu_custom_call.1} parent=51 // pred_region
          %s440 = sand.u32 %s98, 1
          %s441 = scalar_lea.sflag [#allocation4], %s440
          %s442 = sand.u32 %s98, 1
          %s443 = smul.addr %s442, 8
          %s444 = scalar_lea.vmem [#allocation8], %s443
          %445 = dma.done %s441, 128
        $region56: #{tpu_custom_call.1} parent=51 // pred_fallthru
          _
      $region52: #{tpu_custom_call.1} parent=5 // pred_fallthru
        _
    $region6: #{tpu_custom_call.1} parent=1 // loop_footer
      %s20 = sadd.s32 1, %s16
    $region7: #{tpu_custom_call.1} parent=1 // loop_footer_branch
      %15 = sbr.rel target = $region3
    $region8: #{tpu_custom_call.1} parent=1 // loop_exit
      _
    %446 = vsyncpa [#allocation3], 1
    %s447 = scalar_lea.sflag [#allocation3], 1
    %448 = vsyncpa %s447, 1
    %449 = vsyncpa [#allocation6], 1
    %450 = vsyncpa [#allocation4], 1
    %s451 = scalar_lea.sflag [#allocation4], 1
    %452 = vsyncpa %s451, 1

// kernel: tpu_custom_call.1
$region0: #{tpu_custom_call.1}
  #allocation0 [shape = 'u32[]', space=smem, size = 0x4, offset = 0x4, fixed_abs, tag = 'smem constant byte address 0x4 - core index']
  #allocation1 [shape = 'u32[144,128]{1,0:T(1,128)}', space=vmem, size = 0x12000, scoped, tag = 'internal scratch']
  %s0 = inlined_call_operand.hbm [shape: f32[2,8,128], index: 0, kind: input, shape index: {}]
  %s1 = inlined_call_operand.hbm [shape: f32[8,24], index: 1, kind: input, shape index: {}]
  %s2 = inlined_call_operand.hbm [shape: f32[8,24], index: 2, kind: input, shape index: {}]
  %s3 = inlined_call_operand.hbm [shape: f32[2,8,128], index: 3, kind: output, shape index: {}]
  %s4 = sld [smem:[#allocation0]]
  $region57: #{tpu_custom_call.1} parent=0
    _
  %s6 = ssub.s32 1, %s4
  %s7 = scalar_select 0, %s6, %s4
  $region1: #{tpu_custom_call.1} parent=0
    #allocation2 [shape = 'u8[8192]{0}', space=vmem, size = 0x2000, scoped, tag = 'input window, operand 0']
    #allocation3 [shape = 's32[2]{0}', space=sflag, size = 0x8, scoped, tag = 'scoped memory for tpu_custom_call.1']
    #allocation4 [shape = 's32[2]{0}', space=sflag, size = 0x8, scoped, tag = 'scoped memory for tpu_custom_call.1']
    #allocation5 [shape = 'u8[4096]{0}', space=vmem, size = 0x1000, scoped, tag = 'input window, operand 1, single buffered']
    #allocation6 [shape = 's32[1]{0}', space=sflag, size = 0x4, scoped, tag = 'scoped memory for tpu_custom_call.1']
    #allocation7 [shape = 'u8[4096]{0}', space=vmem, size = 0x1000, scoped, tag = 'input window, operand 2, single buffered']
    #allocation8 [shape = 'u8[8192]{0}', space=vmem, size = 0x2000, scoped, tag = 'output window, operand 0']
    %8 = vsyncpa [#allocation3], 0
    %s9 = scalar_lea.sflag [#allocation3], 1
    %10 = vsyncpa %s9, 0
    %11 = vsyncpa [#allocation6], 0
    %12 = vsyncpa [#allocation4], 0
    %s13 = scalar_lea.sflag [#allocation4], 1
    %14 = vsyncpa %s13, 0
    loop: start=0, step=1, limit=4
    $region2: #{tpu_custom_call.1} parent=1 // loop_pre_header
      _
    $region3: #{tpu_custom_call.1} parent=1 // loop_header
      %s16 = sphi 0, %s20
      %p17 = scmp.ge.s32.totalorder %s16, 4
      %s26 = sphi 0, %s28
      %s29 = sphi 0, %s26
      %s30 = sphi 0, %s29
      %s46 = sphi 0, %s30
      %s50 = sphi 0, %s50
      %s52 = sphi 0, %s50
      %s53 = sphi 0, %s52
      %s67 = sphi 0, %s53
      %s71 = sphi 0, %s71
      %s73 = sphi 0, %s71
      %s74 = sphi 0, %s73
      %s88 = sphi 0, %s74
      %s94 = sphi 0, %s96
      %s97 = sphi 0, %s94
      %s98 = sphi 0, %s97
      %s114 = sphi 0, %s98
    $region4: #{tpu_custom_call.1} parent=1 // loop_header_branch
      %19 = sbr.rel (%p17) target = $region8
    $region5: #{tpu_custom_call.1} parent=1 // loop_body
      %s21 = ssub.s32 %s16, 1
      %s22 = ssub.s32 %s16, 2
      %s23 = sadd.s32 %s16, 1
      %s24 = ssub.s32 %s16, %s23
      %p25 = scmp.eq.s32.totalorder %s24, 0
      %s27 = sadd.s32 %s26, 1
      %s28 = scalar_select %p25, %s26, %s27
      %p31 = pneg %p25
      %p32 = scmp.eq.s32.totalorder %s16, 1
      %p33 = por %p31, %p32
      %p34 = scmp.ne.s32.totalorder %s26, %s29
      %p35 = scmp.eq.s32.totalorder %s16, 0
      %p36 = por %p34, %p35
      %p37 = scmp.ne.s32.totalorder %s26, %s29
      %p38 = scmp.eq.s32.totalorder %s21, 1
      %p39 = por %p37, %p38
      %p40 = scmp.ne.s32.totalorder %s29, %s30
      %p41 = scmp.eq.s32.totalorder %s21, 0
      %p42 = por %p40, %p41
      %p43 = scmp.ne.s32.totalorder %s29, %s30
      %p44 = scmp.eq.s32.totalorder %s22, 1
      %p45 = por %p43, %p44
      %p47 = scmp.ne.s32.totalorder %s30, %s46
      %p48 = scmp.eq.s32.totalorder %s22, 0
      %p49 = por %p47, %p48
      %s51 = sadd.s32 %s50, 1
      %p54 = scmp.eq.s32.totalorder %s16, 1
      %p55 = scmp.ne.s32.totalorder %s50, %s52
      %p56 = scmp.eq.s32.totalorder %s16, 0
      %p57 = por %p55, %p56
      %p58 = scmp.ne.s32.totalorder %s50, %s52
      %p59 = scmp.eq.s32.totalorder %s21, 1
      %p60 = por %p58, %p59
      %p61 = scmp.ne.s32.totalorder %s52, %s53
      %p62 = scmp.eq.s32.totalorder %s21, 0
      %p63 = por %p61, %p62
      %p64 = scmp.ne.s32.totalorder %s52, %s53
      %p65 = scmp.eq.s32.totalorder %s22, 1
      %p66 = por %p64, %p65
      %p68 = scmp.ne.s32.totalorder %s53, %s67
      %p69 = scmp.eq.s32.totalorder %s22, 0
      %p70 = por %p68, %p69
      %s72 = sadd.s32 %s71, 1
      %p75 = scmp.eq.s32.totalorder %s16, 1
      %p76 = scmp.ne.s32.totalorder %s71, %s73
      %p77 = scmp.eq.s32.totalorder %s16, 0
      %p78 = por %p76, %p77
      %p79 = scmp.ne.s32.totalorder %s71, %s73
      %p80 = scmp.eq.s32.totalorder %s21, 1
      %p81 = por %p79, %p80
      %p82 = scmp.ne.s32.totalorder %s73, %s74
      %p83 = scmp.eq.s32.totalorder %s21, 0
      %p84 = por %p82, %p83
      %p85 = scmp.ne.s32.totalorder %s73, %s74
      %p86 = scmp.eq.s32.totalorder %s22, 1
      %p87 = por %p85, %p86
      %p89 = scmp.ne.s32.totalorder %s74, %s88
      %p90 = scmp.eq.s32.totalorder %s22, 0
      %p91 = por %p89, %p90
      %s92 = ssub.s32 %s16, %s23
      %p93 = scmp.eq.s32.totalorder %s92, 0
      %s95 = sadd.s32 %s94, 1
      %s96 = scalar_select %p93, %s94, %s95
      %p99 = pneg %p93
      %p100 = scmp.eq.s32.totalorder %s16, 1
      %p101 = por %p99, %p100
      %p102 = scmp.ne.s32.totalorder %s94, %s97
      %p103 = scmp.eq.s32.totalorder %s16, 0
      %p104 = por %p102, %p103
      %p105 = scmp.ne.s32.totalorder %s94, %s97
      %p106 = scmp.eq.s32.totalorder %s21, 1
      %p107 = por %p105, %p106
      %p108 = scmp.ne.s32.totalorder %s97, %s98
      %p109 = scmp.eq.s32.totalorder %s21, 0
      %p110 = por %p108, %p109
      %p111 = scmp.ne.s32.totalorder %s97, %s98
      %p112 = scmp.eq.s32.totalorder %s22, 1
      %p113 = por %p111, %p112
      %p115 = scmp.ne.s32.totalorder %s98, %s114
      %p116 = scmp.eq.s32.totalorder %s22, 0
      %p117 = por %p115, %p116
      %p118 = scmp.le.s32.totalorder 1, %s16
      %p119 = scmp.lt.s32.totalorder %s16, 3
      %p120 = pnand %p118, %p119
      %p121 = pneg %p120
      // Predicated region
      $region9: #{tpu_custom_call.1} parent=5 // pred_check
        _
      $region10: #{tpu_custom_call.1} parent=5 // pred_check_branch
        %123 = sbr.rel (%p120) target = $region12
      $region11: #{tpu_custom_call.1} parent=5 // pred_region
        %s124 = ssub.s32 %s16, 1
        // Predicated region
        $region13: #{tpu_custom_call.1} parent=11 // pred_check
          %p125 = pneg %p63
        $region14: #{tpu_custom_call.1} parent=11 // pred_check_branch
          %127 = sbr.rel (%p125) target = $region16
        $region15: #{tpu_custom_call.1} parent=11 // pred_region
          %s129 = ssub.s32 128, 128
          %130 = vsyncadd [#allocation6], %s129
          %s132 = sshll.u32 [#allocation5], 4
          %s133 = int_to_ptr.vmem [resolvable:$true] %s132
          %135 = dma.hbm_to_vmem [thread:$0]  %s1, 128, %s133, [#allocation6]
        $region16: #{tpu_custom_call.1} parent=11 // pred_fallthru
          _
        // Predicated region
        $region17: #{tpu_custom_call.1} parent=11 // pred_check
          %p136 = pneg %p84
        $region18: #{tpu_custom_call.1} parent=11 // pred_check_branch
          %138 = sbr.rel (%p136) target = $region20
        $region19: #{tpu_custom_call.1} parent=11 // pred_region
          %s140 = ssub.s32 128, 128
          %141 = vsyncadd [#allocation6], %s140
          %s143 = sshll.u32 [#allocation7], 4
          %s144 = int_to_ptr.vmem [resolvable:$true] %s143
          %146 = dma.hbm_to_vmem [thread:$0]  %s2, 128, %s144, [#allocation6]
        $region20: #{tpu_custom_call.1} parent=11 // pred_fallthru
          _
      $region12: #{tpu_custom_call.1} parent=5 // pred_fallthru
        _
      %p147 = scmp.lt.s32.totalorder %s16, 2
      // Predicated region
      $region21: #{tpu_custom_call.1} parent=5 // pred_check
        %p148 = pneg %p147
      $region22: #{tpu_custom_call.1} parent=5 // pred_check_branch
        %150 = sbr.rel (%p148) target = $region24
      $region23: #{tpu_custom_call.1} parent=5 // pred_region
        // Predicated region
        $region25: #{tpu_custom_call.1} parent=23 // pred_check
          %p151 = pneg %p36
        $region26: #{tpu_custom_call.1} parent=23 // pred_check_branch
          %153 = sbr.rel (%p151) target = $region28
        $region27: #{tpu_custom_call.1} parent=23 // pred_region
          %s154 = sand.u32 %s26, 1
          %s155 = scalar_lea.sflag [#allocation3], %s154
          %s156 = sand.u32 %s26, 1
          %s157 = smul.addr %s156, 8
          %s158 = scalar_lea.vmem [#allocation2], %s157
          %s160 = ssub.s32 128, 128
          %161 = vsyncadd %s155, %s160
          %s162 = smul.addr %s16, 128
          %s163 = scalar_lea.hbm %s0, %s162
          %s165 = sshll.u32 %s158, 4
          %s166 = int_to_ptr.vmem [resolvable:$true] %s165
          %168 = dma.hbm_to_vmem [thread:$0]  %s163, 128, %s166, %s155
        $region28: #{tpu_custom_call.1} parent=23 // pred_fallthru
          _
      $region24: #{tpu_custom_call.1} parent=5 // pred_fallthru
        _
      %p169 = scmp.le.s32.totalorder 1, %s16
      %p170 = scmp.lt.s32.totalorder %s16, 3
      %p171 = pnand %p169, %p170
      %p172 = pneg %p171
      // Predicated region
      $region29: #{tpu_custom_call.1} parent=5 // pred_check
        _
      $region30: #{tpu_custom_call.1} parent=5 // pred_check_branch
        %174 = sbr.rel (%p171) target = $region32
      $region31: #{tpu_custom_call.1} parent=5 // pred_region
        %s175 = ssub.s32 %s16, 1
        %s176 = sand.u32 %s29, 1
        %s177 = scalar_lea.sflag [#allocation3], %s176
        %s178 = sand.u32 %s29, 1
        %s179 = smul.addr %s178, 8
        %s180 = scalar_lea.vmem [#allocation2], %s179
        // Predicated region
        $region33: #{tpu_custom_call.1} parent=31 // pred_check
          %p181 = pneg %p42
        $region34: #{tpu_custom_call.1} parent=31 // pred_check_branch
          %183 = sbr.rel (%p181) target = $region36
        $region35: #{tpu_custom_call.1} parent=31 // pred_region
          %184 = dma.done %s177, 128
        $region36: #{tpu_custom_call.1} parent=31 // pred_fallthru
          _
        // Predicated region
        $region37: #{tpu_custom_call.1} parent=31 // pred_check
          %p185 = pneg %p63
        $region38: #{tpu_custom_call.1} parent=31 // pred_check_branch
          %187 = sbr.rel (%p185) target = $region40
        $region39: #{tpu_custom_call.1} parent=31 // pred_region
          %188 = dma.done [#allocation6], 128
        $region40: #{tpu_custom_call.1} parent=31 // pred_fallthru
          _
        // Predicated region
        $region41: #{tpu_custom_call.1} parent=31 // pred_check
          %p189 = pneg %p84
        $region42: #{tpu_custom_call.1} parent=31 // pred_check_branch
          %191 = sbr.rel (%p189) target = $region44
        $region43: #{tpu_custom_call.1} parent=31 // pred_region
          %192 = dma.done [#allocation6], 128
        $region44: #{tpu_custom_call.1} parent=31 // pred_fallthru
          _
        %s193 = sand.u32 %s29, 1
        %s194 = scalar_lea.sflag [#allocation3], %s193
        %s195 = sand.u32 %s29, 1
        %s196 = smul.addr %s195, 8
        %s197 = scalar_lea.vmem [#allocation2], %s196
        %p198 = pneg %p42
        %p199 = pneg %p39
        %p200 = pneg %p63
        %p201 = pneg %p60
        %p202 = pneg %p84
        %p203 = pneg %p81
        %p204 = pneg %p110
        %p205 = pneg %p107
        %s206 = sand.u32 %s97, 1
        %s207 = scalar_lea.sflag [#allocation4], %s206
        %s208 = sand.u32 %s97, 1
        %s209 = smul.addr %s208, 8
        %s210 = scalar_lea.vmem [#allocation8], %s209
        %v211 = vlaneseq
        %v212 = vand.u32 %v211, 127
        %vm213 = vcmp.lt.s32.totalorder %v212, 16
        %v214 = vld [vmem:[#allocation5] sm:$0xff]
        %v215 = vld [vmem:[#allocation7] sm:$0xff]
        %v216 = vld [vmem:[%s180] sm:$0xff]
        %vm217 = vcmp.ge.f32.partialorder %v216, 0.0
        %v218 = vmul.f32 %v216, 0.2
        %v219 = vsel %vm217, %v216, %v218
        %220 = vrot.lane.b32.xlu0 %v219, 1
        %v221 = vpop.permute.xlu0 %220
        %222 = vrot.lane.b32.xlu0 %v219, 127
        %v223 = vpop.permute.xlu0 %222
        %vm224 = vcmask 195584
        %v226 = vsel %vm224, %v214, 0
        %228 = vmatprep.subr.mxu0 0.0
        %229 = vmatpush1.msra.mxu0 %v221
        %230 = vmatprep.subr.mxu0 0.0
        %231 = vmatpush1.msra.mxu0 %v219
        %232 = vmatprep.subr.mxu0 0.0
        %233 = vmatpush1.msra.mxu0 %v223
        %234 = vmatprep.subr.mxu0 0.0
        %235 = vmatpush1.msra.mxu0 0.0
        %236 = vmatprep.subr.mxu0 0.0
        %237 = vmatpush1.msra.mxu0 0.0
        %238 = vmatprep.subr.mxu0 0.0
        %239 = vmatpush1.msra.mxu0 0.0
        %240 = vmatprep.subr.mxu0 0.0
        %241 = vmatpush1.msra.mxu0 0.0
        %242 = vmatprep.subr.mxu0 0.0
        %243 = vmatpush1.msra.mxu0 0.0
        %244 = vmatprep.subr.mxu0 0.0
        %245 = vmatpush1.msra.mxu0 0.0
        %246 = vmatprep.subr.mxu0 0.0
        %247 = vmatpush1.msra.mxu0 0.0
        %248 = vmatprep.subr.mxu0 0.0
        %249 = vmatpush1.msra.mxu0 0.0
        %250 = vmatprep.subr.mxu0 0.0
        %251 = vmatpush1.msra.mxu0 0.0
        %252 = vmatprep.subr.mxu0 0.0
        %253 = vmatpush1.msra.mxu0 0.0
        %254 = vmatprep.subr.mxu0 0.0
        %255 = vmatpush1.msra.mxu0 0.0
        %256 = vmatprep.subr.mxu0 0.0
        %257 = vmatpush1.msra.mxu0 0.0
        %258 = vmatprep.subr.mxu0 0.0
        %259 = vmatpush1.msra.mxu0 0.0
        %260 = vmatprep.subr.mxu0 0.0
        %261 = vmatpush1.msra.mxu0 0.0
        %262 = vmatprep.subr.mxu0 0.0
        %263 = vmatpush1.msra.mxu0 0.0
        %264 = vmatprep.subr.mxu0 0.0
        %265 = vmatpush1.msra.mxu0 0.0
        %266 = vmatprep.subr.mxu0 0.0
        %267 = vmatpush1.msra.mxu0 0.0
        %268 = vmatprep.subr.mxu0 0.0
        %269 = vmatpush1.msra.mxu0 0.0
        %270 = vmatprep.subr.mxu0 0.0
        %271 = vmatpush1.msra.mxu0 0.0
        %272 = vmatprep.subr.mxu0 0.0
        %273 = vmatpush1.msra.mxu0 0.0
        %274 = vmatprep.subr.mxu0 0.0
        %275 = vmatpush1.msra.mxu0 0.0
        %276 = vmatprep.subr.mxu0 0.0
        %277 = vmatpush1.msra.mxu0 0.0
        %278 = vmatprep.subr.mxu0 0.0
        %279 = vmatpush1.msra.mxu0 0.0
        %280 = vmatprep.subr.mxu0 0.0
        %281 = vmatpush1.msra.mxu0 0.0
        %282 = vmatprep.subr.mxu0 0.0
        %283 = vmatpush1.msra.mxu0 0.0
        %284 = vmatprep.subr.mxu0 0.0
        %285 = vmatpush1.msra.mxu0 0.0
        %286 = vmatprep.subr.mxu0 0.0
        %287 = vmatpush1.msra.mxu0 0.0
        %288 = vmatprep.subr.mxu0 0.0
        %289 = vmatpush1.msra.mxu0 0.0
        %290 = vmatprep.subr.mxu0 0.0
        %291 = vmatpush1.msra.mxu0 0.0
        %292 = vmatprep.mubr.f32.mxu0 0.0
        %293 = vmatmul.mubr.f32.gmra.mrb[0].mxu0 %v226
        %v294 = vpop.f32.mrb[0].mxu0
        %v295 = vadd.f32 0.0, %v294
        %v296 = vpop.f32.mrb[0].mxu0
        %297 = vdwg.mxu0
        %v298 = vsel %vm213, 1, 0
        %vm299 = vcmp.eq.s32.totalorder %v298, 1
        %v300 = vsel %vm299, %v295, 0.0
        %301 = vadd.xlane.f32.xlu0 %v300
        %v302 = vpop.xlane.xlu0 %301
        %v303 = vmul.f32 %v300, %v300
        %304 = vadd.xlane.f32.xlu0 %v303
        %v305 = vpop.xlane.xlu0 %304
        %v306 = vmul.f32 %v302, 0.0625
        %v307 = vmul.f32 %v305, 0.0625
        %v308 = vmul.f32 %v306, %v306
        %v309 = vsub.f32 %v307, %v308
        %v310 = vmax.f32 %v309, 0.0
        %v311 = vsub.f32 %v300, %v306
        %v312 = vadd.f32 %v310, 1e-05
        %v313 = vrsqrt.pop %v312
        %v314 = vmul.f32 %v311, %v313
        %v315 = vsel %vm299, %v314, 0.0
        %vm316 = vcmp.ge.f32.partialorder %v315, 0.0
        %v317 = vmul.f32 %v315, 0.2
        %v318 = vsel %vm316, %v315, %v317
        %319 = vrot.lane.b32.xlu0 %v318, 1
        %v320 = vpop.permute.xlu0 %319
        %321 = vrot.lane.b32.xlu0 %v318, 127
        %v322 = vpop.permute.xlu0 %321
        %v324 = vsel %vm224, %v215, 0
        %326 = vmatprep.subr.mxu0 0.0
        %327 = vmatpush1.msra.mxu0 %v320
        %328 = vmatprep.subr.mxu0 0.0
        %329 = vmatpush1.msra.mxu0 %v318
        %330 = vmatprep.subr.mxu0 0.0
        %331 = vmatpush1.msra.mxu0 %v322
        %332 = vmatprep.subr.mxu0 0.0
        %333 = vmatpush1.msra.mxu0 0.0
        %334 = vmatprep.subr.mxu0 0.0
        %335 = vmatpush1.msra.mxu0 0.0
        %336 = vmatprep.subr.mxu0 0.0
        %337 = vmatpush1.msra.mxu0 0.0
        %338 = vmatprep.subr.mxu0 0.0
        %339 = vmatpush1.msra.mxu0 0.0
        %340 = vmatprep.subr.mxu0 0.0
        %341 = vmatpush1.msra.mxu0 0.0
        %342 = vmatprep.subr.mxu0 0.0
        %343 = vmatpush1.msra.mxu0 0.0
        %344 = vmatprep.subr.mxu0 0.0
        %345 = vmatpush1.msra.mxu0 0.0
        %346 = vmatprep.subr.mxu0 0.0
        %347 = vmatpush1.msra.mxu0 0.0
        %348 = vmatprep.subr.mxu0 0.0
        %349 = vmatpush1.msra.mxu0 0.0
        %350 = vmatprep.subr.mxu0 0.0
        %351 = vmatpush1.msra.mxu0 0.0
        %352 = vmatprep.subr.mxu0 0.0
        %353 = vmatpush1.msra.mxu0 0.0
        %354 = vmatprep.subr.mxu0 0.0
        %355 = vmatpush1.msra.mxu0 0.0
        %356 = vmatprep.subr.mxu0 0.0
        %357 = vmatpush1.msra.mxu0 0.0
        %358 = vmatprep.subr.mxu0 0.0
        %359 = vmatpush1.msra.mxu0 0.0
        %360 = vmatprep.subr.mxu0 0.0
        %361 = vmatpush1.msra.mxu0 0.0
        %362 = vmatprep.subr.mxu0 0.0
        %363 = vmatpush1.msra.mxu0 0.0
        %364 = vmatprep.subr.mxu0 0.0
        %365 = vmatpush1.msra.mxu0 0.0
        %366 = vmatprep.subr.mxu0 0.0
        %367 = vmatpush1.msra.mxu0 0.0
        %368 = vmatprep.subr.mxu0 0.0
        %369 = vmatpush1.msra.mxu0 0.0
        %370 = vmatprep.subr.mxu0 0.0
        %371 = vmatpush1.msra.mxu0 0.0
        %372 = vmatprep.subr.mxu0 0.0
        %373 = vmatpush1.msra.mxu0 0.0
        %374 = vmatprep.subr.mxu0 0.0
        %375 = vmatpush1.msra.mxu0 0.0
        %376 = vmatprep.subr.mxu0 0.0
        %377 = vmatpush1.msra.mxu0 0.0
        %378 = vmatprep.subr.mxu0 0.0
        %379 = vmatpush1.msra.mxu0 0.0
        %380 = vmatprep.subr.mxu0 0.0
        %381 = vmatpush1.msra.mxu0 0.0
        %382 = vmatprep.subr.mxu0 0.0
        %383 = vmatpush1.msra.mxu0 0.0
        %384 = vmatprep.subr.mxu0 0.0
        %385 = vmatpush1.msra.mxu0 0.0
        %386 = vmatprep.subr.mxu0 0.0
        %387 = vmatpush1.msra.mxu0 0.0
        %388 = vmatprep.subr.mxu0 0.0
        %389 = vmatpush1.msra.mxu0 0.0
        %390 = vmatprep.mubr.f32.mxu0 0.0
        %391 = vmatmul.mubr.f32.gmra.mrb[0].mxu0 %v324
        %v392 = vpop.f32.mrb[0].mxu0
        %v393 = vadd.f32 0.0, %v392
        %v394 = vpop.f32.mrb[0].mxu0
        %395 = vdwg.mxu0
        %v396 = vsel %vm299, %v393, 0.0
        %397 = vadd.xlane.f32.xlu0 %v396
        %v398 = vpop.xlane.xlu0 %397
        %v399 = vmul.f32 %v396, %v396
        %400 = vadd.xlane.f32.xlu0 %v399
        %v401 = vpop.xlane.xlu0 %400
        %v402 = vmul.f32 %v398, 0.0625
        %v403 = vmul.f32 %v401, 0.0625
        %v404 = vmul.f32 %v402, %v402
        %v405 = vsub.f32 %v403, %v404
        %v406 = vmax.f32 %v405, 0.0
        %v407 = vsub.f32 %v396, %v402
        %v408 = vadd.f32 %v406, 1e-05
        %v409 = vrsqrt.pop %v408
        %v410 = vmul.f32 %v407, %v409
        %v411 = vsel %vm299, %v410, 0.0
        %v412 = vadd.f32 %v216, %v411
        %413 = vst [vmem:[%s210] sm:$0xff] %v412
        %s414 = sand.u32 %s97, 1
        %s415 = scalar_lea.sflag [#allocation4], %s414
        %s416 = sand.u32 %s97, 1
        %s417 = smul.addr %s416, 8
        %s418 = scalar_lea.vmem [#allocation8], %s417
        // Predicated region
        $region45: #{tpu_custom_call.1} parent=31 // pred_check
          %p419 = pneg %p107
        $region46: #{tpu_custom_call.1} parent=31 // pred_check_branch
          %421 = sbr.rel (%p419) target = $region48
        $region47: #{tpu_custom_call.1} parent=31 // pred_region
          %s423 = ssub.s32 128, 128
          %424 = vsyncadd %s415, %s423
          %s425 = smul.addr %s21, 128
          %s426 = scalar_lea.hbm %s3, %s425
          %s428 = sshll.u32 %s418, 4
          %s429 = int_to_ptr.vmem [resolvable:$true] %s428
          %431 = dma.vmem_to_hbm [thread:$0]  %s429, 128, %s426, %s415
        $region48: #{tpu_custom_call.1} parent=31 // pred_fallthru
          _
      $region32: #{tpu_custom_call.1} parent=5 // pred_fallthru
        _
      %p432 = scmp.le.s32.totalorder 2, %s16
      // Predicated region
      $region49: #{tpu_custom_call.1} parent=5 // pred_check
        %p433 = pneg %p432
      $region50: #{tpu_custom_call.1} parent=5 // pred_check_branch
        %435 = sbr.rel (%p433) target = $region52
      $region51: #{tpu_custom_call.1} parent=5 // pred_region
        %s436 = ssub.s32 %s16, 2
        // Predicated region
        $region53: #{tpu_custom_call.1} parent=51 // pred_check
          %p437 = pneg %p113
        $region54: #{tpu_custom_call.1} parent=51 // pred_check_branch
          %439 = sbr.rel (%p437) target = $region56
        $region55: #{tpu_custom_call.1} parent=51 // pred_region
          %s440 = sand.u32 %s98, 1
          %s441 = scalar_lea.sflag [#allocation4], %s440
          %s442 = sand.u32 %s98, 1
          %s443 = smul.addr %s442, 8
          %s444 = scalar_lea.vmem [#allocation8], %s443
          %445 = dma.done %s441, 128
        $region56: #{tpu_custom_call.1} parent=51 // pred_fallthru
          _
      $region52: #{tpu_custom_call.1} parent=5 // pred_fallthru
        _
    $region6: #{tpu_custom_call.1} parent=1 // loop_footer
      %s20 = sadd.s32 1, %s16
    $region7: #{tpu_custom_call.1} parent=1 // loop_footer_branch
      %15 = sbr.rel target = $region3
    $region8: #{tpu_custom_call.1} parent=1 // loop_exit
      _
    %446 = vsyncpa [#allocation3], 1
    %s447 = scalar_lea.sflag [#allocation3], 1
    %448 = vsyncpa %s447, 1
    %449 = vsyncpa [#allocation6], 1
    %450 = vsyncpa [#allocation4], 1
    %s451 = scalar_lea.sflag [#allocation4], 1
    %452 = vsyncpa %s451, 1

</llo_original>
